<compile_context>
chip_gen: v7x
topology: tpu7x:2x2x1
jax: 0.10.0
libtpu: 0.0.40
codegen_flags: <defaults>
</compile_context>

<pallas_src>
import jax
import jax.numpy as jnp
from jax.experimental import pallas as pl
from jax.experimental.pallas import tpu as pltpu

LANE = 128      # vreg lane width
SUBLANE = 8     # vreg sublane count (f32)

_VMEM_BUDGET = 40 * 1024 * 1024   # tile-sizing budget (fits v7x 64 MiB w/ headroom)
_VMEM_LIMIT = 48 * 1024 * 1024    # explicit scoped-VMEM limit handed to Mosaic


def _round_up(x, m):
    return ((x + m - 1) // m) * m


def _bspec(shape, index_map, buffers=None):
    """BlockSpec with an optional explicit buffer count (graceful fallback)."""
    if buffers is not None and hasattr(pl, "Buffered"):
        try:
            return pl.BlockSpec(shape, index_map, pipeline_mode=pl.Buffered(buffers))
        except TypeError:   # older jax without the pipeline_mode kwarg
            pass
    return pl.BlockSpec(shape, index_map)


def _vmem_estimate(tm, tk, dim_in, n_out, k_tiles):
    """Rough VMEM footprint (bytes) of one pipelined step."""
    w_buf = 2 if k_tiles > 1 else 1          # weight blocks re-fetched only when K-tiled
    x_bytes = 2 * tm * dim_in * 4            # double-buffered f32 x tiles
    o_bytes = 2 * tm * n_out * 4             # double-buffered f32 out tiles
    w_bytes = w_buf * (dim_in * tk * 2 + tk * 4 + tk * n_out * 2) + n_out * 4
    acc_bytes = tm * n_out * 4               # accumulator scratch
    h_bytes = tm * tk * (4 + 2)              # f32 hidden temp + its bf16 cast
    x_cast = tm * dim_in * 2                 # bf16 cast of the x tile
    return x_bytes + o_bytes + w_bytes + acc_bytes + h_bytes + x_cast


# ------------------------------ Pallas kernel ------------------------------

def _mlp_kernel(x_ref, w1_ref, b1_ref, w2_ref, b2_ref, o_ref, acc_ref):
    """One (row-tile, hidden-tile) step of y = relu(x @ W1 + b1) @ W2 + b2."""
    k = pl.program_id(1)

    @pl.when(k == 0)
    def _init():
        acc_ref[...] = jnp.zeros_like(acc_ref)

    # bf16 MXU operands, f32 accumulation; bias add & ReLU in f32.
    x_bf = x_ref[...].astype(jnp.bfloat16)
    h = jnp.dot(x_bf, w1_ref[...], preferred_element_type=jnp.float32)
    h = jnp.maximum(h + b1_ref[...], 0.0)
    acc_ref[...] += jnp.dot(h.astype(jnp.bfloat16), w2_ref[...],
                            preferred_element_type=jnp.float32)

    @pl.when(k == pl.num_programs(1) - 1)
    def _finalize():
        o_ref[...] = (acc_ref[...] + b2_ref[...]).astype(o_ref.dtype)


# ------------------------------ host wrapper -------------------------------

def mlp_forward(params, x, *, block_m=256, block_k=512):
    """x: (..., dim_in) float32 -> (..., dim_out). Single fused pallas_call."""
    w1 = params["w1"].astype(jnp.bfloat16)   # MXU-native operand dtype
    b1 = params["b1"].astype(jnp.float32)
    w2 = params["w2"].astype(jnp.bfloat16)
    b2 = params["b2"].astype(jnp.float32)

    dim_in, dim_hidden = params["w1"].shape
    dim_out = params["w2"].shape[1]

    lead = x.shape[:-1]
    M = 1
    for d in lead:
        M *= int(d)
    x2 = x.reshape(M, dim_in).astype(jnp.float32)

    # ---- output column layout: lane-dense only when it is cheap -------------
    if dim_out % LANE == 0 or dim_out < LANE:
        n_out = dim_out                      # tiny dim_out: accept masked store
    else:
        n_out = _round_up(dim_out, LANE)     # large dim_out: unmasked vst

    # ---- hidden (reduction) tiling -------------------------------------------
    tk = dim_hidden if dim_hidden <= block_k else block_k   # block_k is 128-multiple

    # ---- balanced row tiling; >= 2 grid steps along M when M allows ----------
    n_m = pl.cdiv(M, block_m)
    if M >= 2 * SUBLANE:
        n_m = max(n_m, 2)                    # give v7x's second TensorCore work
    tm = _round_up(pl.cdiv(M, n_m), SUBLANE)

    # ---- shrink tiles until the VMEM budget fits ------------------------------
    while _vmem_estimate(tm, tk, dim_in, n_out,
                         _round_up(dim_hidden, tk) // tk) > _VMEM_BUDGET:
        if tm > SUBLANE:
            tm = _round_up(tm // 2, SUBLANE)
        elif tk > LANE and dim_hidden > LANE:
            tk = _round_up(tk // 2, LANE)
        else:
            break

    n_m = pl.cdiv(M, tm)
    M_pad = n_m * tm
    K_pad = _round_up(dim_hidden, tk)
    n_k = K_pad // tk

    # ---- pad operands only when actually needed -------------------------------
    if M_pad != M:
        x2 = jnp.pad(x2, ((0, M_pad - M), (0, 0)))
    if K_pad != dim_hidden:
        w1 = jnp.pad(w1, ((0, 0), (0, K_pad - dim_hidden)))
        b1 = jnp.pad(b1, ((0, 0), (0, K_pad - dim_hidden)))
        w2 = jnp.pad(w2, ((0, K_pad - dim_hidden), (0, 0)))
    if n_out != dim_out:
        w2 = jnp.pad(w2, ((0, 0), (0, n_out - dim_out)))
        b2 = jnp.pad(b2, ((0, 0), (0, n_out - dim_out)))

    # Constant-index blocks only need a single VMEM buffer.
    w_bufs = 1 if n_k == 1 else None

    out = pl.pallas_call(
        _mlp_kernel,
        out_shape=jax.ShapeDtypeStruct((M_pad, n_out), jnp.float32),
        grid_spec=pltpu.PrefetchScalarGridSpec(
            num_scalar_prefetch=0,
            grid=(n_m, n_k),
            in_specs=[
                _bspec((tm, dim_in), lambda i, k: (i, 0)),           # x tile (f32)
                _bspec((dim_in, tk), lambda i, k: (0, k), w_bufs),   # W1 (bf16)
                _bspec((1, tk), lambda i, k: (0, k), w_bufs),        # b1 (f32)
                _bspec((tk, n_out), lambda i, k: (k, 0), w_bufs),    # W2 (bf16)
                _bspec((1, n_out), lambda i, k: (0, 0), 1),          # b2 (f32, const)
            ],
            out_specs=pl.BlockSpec((tm, n_out), lambda i, k: (i, 0)),
            scratch_shapes=[pltpu.VMEM((tm, n_out), jnp.float32)],   # f32 accumulator
        ),
        compiler_params=pltpu.CompilerParams(
            # M tiles independent (megacore-shardable); hidden axis is a reduction.
            dimension_semantics=("parallel", "arbitrary"),
            vmem_limit_bytes=_VMEM_LIMIT,
        ),
    )(x2, w1, b1, w2, b2)

    if M_pad != M:
        out = out[:M]
    if n_out != dim_out:
        out = out[:, :dim_out]
    return out.reshape(*lead, dim_out)


# ------------------------------ params & ref -------------------------------

def init_params(key, dim_in, dim_hidden, dim_out):
    k1, k2 = jax.random.split(key)
    # NOTE: stored matmul-ready as (in, out); transpose nn.Linear's (out, in)
    # weights when importing a real PyTorch checkpoint.
    return {
        "w1": 0.1 * jax.random.normal(k1, (dim_in, dim_hidden), jnp.float32),
        "b1": 0.01 * jnp.ones((1, dim_hidden), jnp.float32),
        "w2": 0.1 * jax.random.normal(k2, (dim_hidden, dim_out), jnp.float32),
        "b2": jnp.zeros((1, dim_out), jnp.float32),
    }


def mlp_reference(params, x):
    h = jnp.maximum(x @ params["w1"] + params["b1"], 0.0)
    return h @ params["w2"] + params["b2"]


# --------------------------------- driver ----------------------------------

if __name__ == "__main__":
    batch, seq = 2, 8
    dim_in, dim_hidden, dim_out = 16, 32, 8

    key = jax.random.PRNGKey(0)
    k_x, k_p = jax.random.split(key)
    x = jax.random.normal(k_x, (batch, seq, dim_in), dtype=jnp.float32)
    params = init_params(k_p, dim_in, dim_hidden, dim_out)

    fwd = jax.jit(mlp_forward)
    y = fwd(params, x)
    jax.block_until_ready(y)

    assert y.shape == (batch, seq, dim_out), y.shape

    # numerical check vs. pure-JAX f32 reference (tolerance loosened for the
    # bf16 MXU operands; accumulation stays f32).
    y_ref = mlp_reference(params, x)
    assert jnp.allclose(y, y_ref, atol=2e-2, rtol=2e-2), float(
        jnp.max(jnp.abs(y - y_ref)))

    print("KERNEL_OK")
</pallas_src>

<mosaic_0001>
module attributes {stable_mosaic.version = 11 : i64} {
  func.func @_mlp_kernel(%arg0: i32, %arg1: i32, %arg2: memref<8x16xf32, #tpu.memory_space<vmem>>, %arg3: memref<16x32xbf16, #tpu.memory_space<vmem>>, %arg4: memref<1x32xf32, #tpu.memory_space<vmem>>, %arg5: memref<32x8xbf16, #tpu.memory_space<vmem>>, %arg6: memref<1x8xf32, #tpu.memory_space<vmem>>, %arg7: memref<8x8xf32, #tpu.memory_space<vmem>>, %arg8: memref<8x8xf32, #tpu.memory_space<vmem>>) attributes {dimension_semantics = [#tpu.dimension_semantics<parallel>, #tpu.dimension_semantics<arbitrary>], iteration_bounds = array<i64: 2, 1>, scalar_prefetch = 0 : i64, scratch_operands = 1 : i64, tpu.core_type = #tpu.core_type<tc>, window_params = [{transform_indices = @transform_0, window_bounds = array<i64: 8, 16>}, {pipeline_mode = #tpu.pipeline_mode<synchronous>, transform_indices = @transform_1, window_bounds = array<i64: 16, 32>}, {pipeline_mode = #tpu.pipeline_mode<synchronous>, transform_indices = @transform_2, window_bounds = array<i64: 1, 32>}, {pipeline_mode = #tpu.pipeline_mode<synchronous>, transform_indices = @transform_3, window_bounds = array<i64: 32, 8>}, {pipeline_mode = #tpu.pipeline_mode<synchronous>, transform_indices = @transform_4, window_bounds = array<i64: 1, 8>}, {transform_indices = @transform_5, window_bounds = array<i64: 8, 8>}]} {
    %c0_i32 = arith.constant 0 : i32
    %0 = arith.cmpi eq, %arg1, %c0_i32 : i32
    %1 = arith.extui %0 : i1 to i32
    %c0_i32_0 = arith.constant 0 : i32
    %2 = arith.cmpi ne, %1, %c0_i32_0 : i32
    scf.if %2 {
      %cst_16 = arith.constant 0.000000e+00 : f32
      %21 = vector.broadcast %cst_16 : f32 to vector<8x8xf32>
      %c0_17 = arith.constant 0 : index
      %c0_18 = arith.constant 0 : index
      %22 = vector.load %arg8[%c0_17, %c0_18] : memref<8x8xf32, #tpu.memory_space<vmem>>, vector<8x8xf32>
      tpu.vector_store %arg8[%c0_17, %c0_18], %21 {strides = array<i32>} : memref<8x8xf32, #tpu.memory_space<vmem>>, vector<8x8xf32>,
    } else {
    }
    %c0 = arith.constant 0 : index
    %c0_1 = arith.constant 0 : index
    %3 = vector.load %arg2[%c0, %c0_1] : memref<8x16xf32, #tpu.memory_space<vmem>>, vector<8x16xf32>
    %4 = arith.truncf %3 : vector<8x16xf32> to vector<8x16xbf16>
    %c0_2 = arith.constant 0 : index
    %c0_3 = arith.constant 0 : index
    %5 = vector.load %arg3[%c0_2, %c0_3] : memref<16x32xbf16, #tpu.memory_space<vmem>>, vector<16x32xbf16>
    %cst = arith.constant dense<0.000000e+00> : vector<8x32xf32>
    %6 = tpu.matmul %4, %5, %cst {dimension_numbers = #tpu.dot_dimension_numbers<[1], [0], [0], [1], [0, 0, 1, 1], [], []>} : vector<8x16xbf16>, vector<16x32xbf16>, vector<8x32xf32> -> vector<8x32xf32>
    %c0_4 = arith.constant 0 : index
    %c0_5 = arith.constant 0 : index
    %7 = vector.load %arg4[%c0_4, %c0_5] : memref<1x32xf32, #tpu.memory_space<vmem>>, vector<1x32xf32>
    %8 = vector.broadcast %7 : vector<1x32xf32> to vector<8x32xf32>
    %9 = arith.addf %6, %8 : vector<8x32xf32>
    %cst_6 = arith.constant 0.000000e+00 : f32
    %10 = vector.broadcast %cst_6 : f32 to vector<8x32xf32>
    %11 = arith.maximumf %9, %10 : vector<8x32xf32>
    %c0_7 = arith.constant 0 : index
    %c0_8 = arith.constant 0 : index
    %12 = vector.load %arg8[%c0_7, %c0_8] : memref<8x8xf32, #tpu.memory_space<vmem>>, vector<8x8xf32>
    %13 = arith.truncf %11 : vector<8x32xf32> to vector<8x32xbf16>
    %c0_9 = arith.constant 0 : index
    %c0_10 = arith.constant 0 : index
    %14 = vector.load %arg5[%c0_9, %c0_10] : memref<32x8xbf16, #tpu.memory_space<vmem>>, vector<32x8xbf16>
    %cst_11 = arith.constant dense<0.000000e+00> : vector<8x8xf32>
    %15 = tpu.matmul %13, %14, %cst_11 {dimension_numbers = #tpu.dot_dimension_numbers<[1], [0], [0], [1], [0, 0, 1, 1], [], []>} : vector<8x32xbf16>, vector<32x8xbf16>, vector<8x8xf32> -> vector<8x8xf32>
    %16 = arith.addf %12, %15 : vector<8x8xf32>
    %c0_12 = arith.constant 0 : index
    %c0_13 = arith.constant 0 : index
    %17 = vector.load %arg8[%c0_12, %c0_13] : memref<8x8xf32, #tpu.memory_space<vmem>>, vector<8x8xf32>
    tpu.vector_store %arg8[%c0_12, %c0_13], %16 {strides = array<i32>} : memref<8x8xf32, #tpu.memory_space<vmem>>, vector<8x8xf32>,
    %c0_i32_14 = arith.constant 0 : i32
    %18 = arith.cmpi eq, %arg1, %c0_i32_14 : i32
    %19 = arith.extui %18 : i1 to i32
    %c0_i32_15 = arith.constant 0 : i32
    %20 = arith.cmpi ne, %19, %c0_i32_15 : i32
    scf.if %20 {
      %c0_16 = arith.constant 0 : index
      %c0_17 = arith.constant 0 : index
      %21 = vector.load %arg8[%c0_16, %c0_17] : memref<8x8xf32, #tpu.memory_space<vmem>>, vector<8x8xf32>
      %c0_18 = arith.constant 0 : index
      %c0_19 = arith.constant 0 : index
      %22 = vector.load %arg6[%c0_18, %c0_19] : memref<1x8xf32, #tpu.memory_space<vmem>>, vector<1x8xf32>
      %23 = vector.broadcast %22 : vector<1x8xf32> to vector<8x8xf32>
      %24 = arith.addf %21, %23 : vector<8x8xf32>
      %c0_20 = arith.constant 0 : index
      %c0_21 = arith.constant 0 : index
      %25 = vector.load %arg7[%c0_20, %c0_21] : memref<8x8xf32, #tpu.memory_space<vmem>>, vector<8x8xf32>
      tpu.vector_store %arg7[%c0_20, %c0_21], %24 {strides = array<i32>} : memref<8x8xf32, #tpu.memory_space<vmem>>, vector<8x8xf32>,
    } else {
    }
    return
  }
  func.func @transform_0(%arg0: i32, %arg1: i32) -> (i32, i32) {
    %c0_i32 = arith.constant 0 : i32
    %c0_i32_0 = arith.constant 0 : i32
    return %arg0, %c0_i32 : i32, i32
  }
  func.func @transform_1(%arg0: i32, %arg1: i32) -> (i32, i32) {
    %c0_i32 = arith.constant 0 : i32
    %c0_i32_0 = arith.constant 0 : i32
    return %c0_i32, %arg1 : i32, i32
  }
  func.func @transform_2(%arg0: i32, %arg1: i32) -> (i32, i32) {
    %c0_i32 = arith.constant 0 : i32
    %c0_i32_0 = arith.constant 0 : i32
    return %c0_i32, %arg1 : i32, i32
  }
  func.func @transform_3(%arg0: i32, %arg1: i32) -> (i32, i32) {
    %c0_i32 = arith.constant 0 : i32
    %c0_i32_0 = arith.constant 0 : i32
    return %arg1, %c0_i32 : i32, i32
  }
  func.func @transform_4(%arg0: i32, %arg1: i32) -> (i32, i32) {
    %c0_i32 = arith.constant 0 : i32
    %c0_i32_0 = arith.constant 0 : i32
    %c0_i32_1 = arith.constant 0 : i32
    return %c0_i32, %c0_i32_0 : i32, i32
  }
  func.func @transform_5(%arg0: i32, %arg1: i32) -> (i32, i32) {
    %c0_i32 = arith.constant 0 : i32
    %c0_i32_0 = arith.constant 0 : i32
    return %arg0, %c0_i32 : i32, i32
  }
}

</mosaic_0001>

<llo_original>
// kernel: mlp_forward.1
$region0: #{mlp_forward.1}
  #allocation0 [shape = 'u32[]', space=smem, size = 0x4, offset = 0x4, fixed_abs, tag = 'smem constant byte address 0x4 - core index']
  #allocation1 [shape = 'u32[144,128]{1,0:T(1,128)}', space=vmem, size = 0x12000, scoped, tag = 'internal scratch']
  #allocation2 [shape = 'f32[8,8]{1,0:T(8,128)}', space=vmem, size = 0x1000, scoped, tag = 'scratch operand']
  %s0 = inlined_call_operand.vmem [shape: f32[16,16], index: 0, kind: input, shape index: {}]
  %s1 = inlined_call_operand.vmem [shape: bf16[16,32], index: 1, kind: input, shape index: {}]
  %s2 = inlined_call_operand.vmem [shape: f32[1,32], index: 2, kind: input, shape index: {}]
  %s3 = inlined_call_operand.vmem [shape: bf16[32,8], index: 3, kind: input, shape index: {}]
  %s4 = inlined_call_operand.vmem [shape: f32[1,8], index: 4, kind: input, shape index: {}]
  %s5 = inlined_call_operand.hbm [shape: f32[16,8], index: 5, kind: output, shape index: {}]
  %s6 = sld [smem:[#allocation0]]
  $region61: #{mlp_forward.1} parent=0
    _
  %s8 = ssub.s32 1, %s6
  %s9 = scalar_select 0, %s8, %s6
  $region1: #{mlp_forward.1} parent=0
    #allocation3 [shape = 'u8[8192]{0}', space=vmem, size = 0x2000, scoped, tag = 'output window, operand 0']
    #allocation4 [shape = 's32[2]{0}', space=sflag, size = 0x8, scoped, tag = 'scoped memory for mlp_forward.1']
    %10 = vsyncpa [#allocation4], 0
    %s11 = scalar_lea.sflag [#allocation4], 1
    %12 = vsyncpa %s11, 0
    loop: start=0, step=1, limit=4
    $region2: #{mlp_forward.1} parent=1 // loop_pre_header
      _
    $region3: #{mlp_forward.1} parent=1 // loop_header
      %s14 = sphi 0, %s18
      %p15 = scmp.ge.s32.totalorder %s14, 4
      %s21 = sphi 0, %s33
      %s22 = sphi 0, %s29
      %s23 = sphi 0, %s21
      %s24 = sphi 0, %s22
      %s25 = sphi 0, %s23
      %s26 = sphi 0, %s24
      %s36 = sphi 0, %s38
      %s39 = sphi 0, %s36
      %s40 = sphi 0, %s39
      %s56 = sphi 0, %s40
      %s62 = sphi 0, %s64
      %s65 = sphi 0, %s62
      %s66 = sphi 0, %s65
      %s82 = sphi 0, %s66
      %s88 = sphi 0, %s90
      %s91 = sphi 0, %s88
      %s92 = sphi 0, %s91
      %s108 = sphi 0, %s92
      %s114 = sphi 0, %s116
      %s117 = sphi 0, %s114
      %s118 = sphi 0, %s117
      %s134 = sphi 0, %s118
      %s138 = sphi 0, %s138
      %s140 = sphi 0, %s138
      %s141 = sphi 0, %s140
      %s155 = sphi 0, %s141
      %s161 = sphi 0, %s163
      %s164 = sphi 0, %s161
      %s165 = sphi 0, %s164
      %s181 = sphi 0, %s165
    $region4: #{mlp_forward.1} parent=1 // loop_header_branch
      %17 = sbr.rel (%p15) target = $region8
    $region5: #{mlp_forward.1} parent=1 // loop_body
      %s19 = ssub.s32 %s14, 1
      %s20 = ssub.s32 %s14, 2
      %s27 = sadd.s32 1, %s22
      %p28 = scmp.ge.s32.totalorder %s27, 1
      %s29 = scalar_select %p28, 0, %s27
      %s30 = sadd.s32 1, %s21
      %s31 = scalar_select %p28, %s30, %s21
      %p32 = scmp.ge.s32.totalorder %s31, 2
      %s33 = scalar_select %p32, 0, %s31
      %s34 = ssub.s32 %s21, %s33
      %p35 = scmp.eq.s32.totalorder %s34, 0
      %s37 = sadd.s32 %s36, 1
      %s38 = scalar_select %p35, %s36, %s37
      %p41 = pneg %p35
      %p42 = scmp.eq.s32.totalorder %s14, 1
      %p43 = por %p41, %p42
      %p44 = scmp.ne.s32.totalorder %s36, %s39
      %p45 = scmp.eq.s32.totalorder %s14, 0
      %p46 = por %p44, %p45
      %p47 = scmp.ne.s32.totalorder %s36, %s39
      %p48 = scmp.eq.s32.totalorder %s19, 1
      %p49 = por %p47, %p48
      %p50 = scmp.ne.s32.totalorder %s39, %s40
      %p51 = scmp.eq.s32.totalorder %s19, 0
      %p52 = por %p50, %p51
      %p53 = scmp.ne.s32.totalorder %s39, %s40
      %p54 = scmp.eq.s32.totalorder %s20, 1
      %p55 = por %p53, %p54
      %p57 = scmp.ne.s32.totalorder %s40, %s56
      %p58 = scmp.eq.s32.totalorder %s20, 0
      %p59 = por %p57, %p58
      %s60 = ssub.s32 %s22, %s29
      %p61 = scmp.eq.s32.totalorder %s60, 0
      %s63 = sadd.s32 %s62, 1
      %s64 = scalar_select %p61, %s62, %s63
      %p67 = pneg %p61
      %p68 = scmp.eq.s32.totalorder %s14, 1
      %p69 = por %p67, %p68
      %p70 = scmp.ne.s32.totalorder %s62, %s65
      %p71 = scmp.eq.s32.totalorder %s14, 0
      %p72 = por %p70, %p71
      %p73 = scmp.ne.s32.totalorder %s62, %s65
      %p74 = scmp.eq.s32.totalorder %s19, 1
      %p75 = por %p73, %p74
      %p76 = scmp.ne.s32.totalorder %s65, %s66
      %p77 = scmp.eq.s32.totalorder %s19, 0
      %p78 = por %p76, %p77
      %p79 = scmp.ne.s32.totalorder %s65, %s66
      %p80 = scmp.eq.s32.totalorder %s20, 1
      %p81 = por %p79, %p80
      %p83 = scmp.ne.s32.totalorder %s66, %s82
      %p84 = scmp.eq.s32.totalorder %s20, 0
      %p85 = por %p83, %p84
      %s86 = ssub.s32 %s22, %s29
      %p87 = scmp.eq.s32.totalorder %s86, 0
      %s89 = sadd.s32 %s88, 1
      %s90 = scalar_select %p87, %s88, %s89
      %p93 = pneg %p87
      %p94 = scmp.eq.s32.totalorder %s14, 1
      %p95 = por %p93, %p94
      %p96 = scmp.ne.s32.totalorder %s88, %s91
      %p97 = scmp.eq.s32.totalorder %s14, 0
      %p98 = por %p96, %p97
      %p99 = scmp.ne.s32.totalorder %s88, %s91
      %p100 = scmp.eq.s32.totalorder %s19, 1
      %p101 = por %p99, %p100
      %p102 = scmp.ne.s32.totalorder %s91, %s92
      %p103 = scmp.eq.s32.totalorder %s19, 0
      %p104 = por %p102, %p103
      %p105 = scmp.ne.s32.totalorder %s91, %s92
      %p106 = scmp.eq.s32.totalorder %s20, 1
      %p107 = por %p105, %p106
      %p109 = scmp.ne.s32.totalorder %s92, %s108
      %p110 = scmp.eq.s32.totalorder %s20, 0
      %p111 = por %p109, %p110
      %s112 = ssub.s32 %s22, %s29
      %p113 = scmp.eq.s32.totalorder %s112, 0
      %s115 = sadd.s32 %s114, 1
      %s116 = scalar_select %p113, %s114, %s115
      %p119 = pneg %p113
      %p120 = scmp.eq.s32.totalorder %s14, 1
      %p121 = por %p119, %p120
      %p122 = scmp.ne.s32.totalorder %s114, %s117
      %p123 = scmp.eq.s32.totalorder %s14, 0
      %p124 = por %p122, %p123
      %p125 = scmp.ne.s32.totalorder %s114, %s117
      %p126 = scmp.eq.s32.totalorder %s19, 1
      %p127 = por %p125, %p126
      %p128 = scmp.ne.s32.totalorder %s117, %s118
      %p129 = scmp.eq.s32.totalorder %s19, 0
      %p130 = por %p128, %p129
      %p131 = scmp.ne.s32.totalorder %s117, %s118
      %p132 = scmp.eq.s32.totalorder %s20, 1
      %p133 = por %p131, %p132
      %p135 = scmp.ne.s32.totalorder %s118, %s134
      %p136 = scmp.eq.s32.totalorder %s20, 0
      %p137 = por %p135, %p136
      %s139 = sadd.s32 %s138, 1
      %p142 = scmp.eq.s32.totalorder %s14, 1
      %p143 = scmp.ne.s32.totalorder %s138, %s140
      %p144 = scmp.eq.s32.totalorder %s14, 0
      %p145 = por %p143, %p144
      %p146 = scmp.ne.s32.totalorder %s138, %s140
      %p147 = scmp.eq.s32.totalorder %s19, 1
      %p148 = por %p146, %p147
      %p149 = scmp.ne.s32.totalorder %s140, %s141
      %p150 = scmp.eq.s32.totalorder %s19, 0
      %p151 = por %p149, %p150
      %p152 = scmp.ne.s32.totalorder %s140, %s141
      %p153 = scmp.eq.s32.totalorder %s20, 1
      %p154 = por %p152, %p153
      %p156 = scmp.ne.s32.totalorder %s141, %s155
      %p157 = scmp.eq.s32.totalorder %s20, 0
      %p158 = por %p156, %p157
      %s159 = ssub.s32 %s21, %s33
      %p160 = scmp.eq.s32.totalorder %s159, 0
      %s162 = sadd.s32 %s161, 1
      %s163 = scalar_select %p160, %s161, %s162
      %p166 = pneg %p160
      %p167 = scmp.eq.s32.totalorder %s14, 1
      %p168 = por %p166, %p167
      %p169 = scmp.ne.s32.totalorder %s161, %s164
      %p170 = scmp.eq.s32.totalorder %s14, 0
      %p171 = por %p169, %p170
      %p172 = scmp.ne.s32.totalorder %s161, %s164
      %p173 = scmp.eq.s32.totalorder %s19, 1
      %p174 = por %p172, %p173
      %p175 = scmp.ne.s32.totalorder %s164, %s165
      %p176 = scmp.eq.s32.totalorder %s19, 0
      %p177 = por %p175, %p176
      %p178 = scmp.ne.s32.totalorder %s164, %s165
      %p179 = scmp.eq.s32.totalorder %s20, 1
      %p180 = por %p178, %p179
      %p182 = scmp.ne.s32.totalorder %s165, %s181
      %p183 = scmp.eq.s32.totalorder %s20, 0
      %p184 = por %p182, %p183
      %p185 = scmp.le.s32.totalorder 1, %s14
      %p186 = scmp.lt.s32.totalorder %s14, 3
      %p187 = pnand %p185, %p186
      %p188 = pneg %p187
      // Predicated region
      $region9: #{mlp_forward.1} parent=5 // pred_check
        _
      $region10: #{mlp_forward.1} parent=5 // pred_check_branch
        %190 = sbr.rel (%p187) target = $region12
      $region11: #{mlp_forward.1} parent=5 // pred_region
        %s191 = ssub.s32 %s14, 1
        // Predicated region
        $region13: #{mlp_forward.1} parent=11 // pred_check
          %p192 = pneg %p78
        $region14: #{mlp_forward.1} parent=11 // pred_check_branch
          %194 = sbr.rel (%p192) target = $region16
        $region15: #{mlp_forward.1} parent=11 // pred_region
          %p195 = scmp.lt.s32.totalorder %s24, 0
          %s196 = scalar_select %p195, %s24, 0
          %s197 = smul.addr %s196, 4
          %s198 = scalar_lea.vmem %s1, %s197
        $region16: #{mlp_forward.1} parent=11 // pred_fallthru
          _
        // Predicated region
        $region17: #{mlp_forward.1} parent=11 // pred_check
          %p199 = pneg %p104
        $region18: #{mlp_forward.1} parent=11 // pred_check_branch
          %201 = sbr.rel (%p199) target = $region20
        $region19: #{mlp_forward.1} parent=11 // pred_region
          %p202 = scmp.lt.s32.totalorder %s24, 0
          %s203 = scalar_select %p202, %s24, 0
          %s204 = scalar_lea.vmem %s2, %s203
        $region20: #{mlp_forward.1} parent=11 // pred_fallthru
          _
        // Predicated region
        $region21: #{mlp_forward.1} parent=11 // pred_check
          %p205 = pneg %p130
        $region22: #{mlp_forward.1} parent=11 // pred_check_branch
          %207 = sbr.rel (%p205) target = $region24
        $region23: #{mlp_forward.1} parent=11 // pred_region
          %s208 = smul.u32 4, %s24
          %p209 = scmp.lt.s32.totalorder %s208, 3
          %s210 = scalar_select %p209, %s208, 3
          %s211 = smul.addr %s210, 4
          %s212 = scalar_lea.vmem %s3, %s211
          %s213 = smul.u32 4, %s24
        $region24: #{mlp_forward.1} parent=11 // pred_fallthru
          _
        // Predicated region
        $region25: #{mlp_forward.1} parent=11 // pred_check
          %p214 = pneg %p151
        $region26: #{mlp_forward.1} parent=11 // pred_check_branch
          %216 = sbr.rel (%p214) target = $region28
        $region27: #{mlp_forward.1} parent=11 // pred_region
          _
        $region28: #{mlp_forward.1} parent=11 // pred_fallthru
          _
      $region12: #{mlp_forward.1} parent=5 // pred_fallthru
        _
      %p217 = scmp.lt.s32.totalorder %s14, 2
      // Predicated region
      $region29: #{mlp_forward.1} parent=5 // pred_check
        %p218 = pneg %p217
      $region30: #{mlp_forward.1} parent=5 // pred_check_branch
        %220 = sbr.rel (%p218) target = $region32
      $region31: #{mlp_forward.1} parent=5 // pred_region
        // Predicated region
        $region33: #{mlp_forward.1} parent=31 // pred_check
          %p221 = pneg %p46
        $region34: #{mlp_forward.1} parent=31 // pred_check_branch
          %223 = sbr.rel (%p221) target = $region36
        $region35: #{mlp_forward.1} parent=31 // pred_region
          %p224 = scmp.lt.s32.totalorder %s21, 1
          %s225 = scalar_select %p224, %s21, 1
          %s226 = smul.addr %s225, 8
          %s227 = scalar_lea.vmem %s0, %s226
        $region36: #{mlp_forward.1} parent=31 // pred_fallthru
          _
      $region32: #{mlp_forward.1} parent=5 // pred_fallthru
        _
      %p228 = scmp.le.s32.totalorder 1, %s14
      %p229 = scmp.lt.s32.totalorder %s14, 3
      %p230 = pnand %p228, %p229
      %p231 = pneg %p230
      // Predicated region
      $region37: #{mlp_forward.1} parent=5 // pred_check
        _
      $region38: #{mlp_forward.1} parent=5 // pred_check_branch
        %233 = sbr.rel (%p230) target = $region40
      $region39: #{mlp_forward.1} parent=5 // pred_region
        %s234 = ssub.s32 %s14, 1
        %p235 = scmp.lt.s32.totalorder %s23, 1
        %s236 = scalar_select %p235, %s23, 1
        %s237 = smul.addr %s236, 8
        %s238 = scalar_lea.vmem %s0, %s237
        %p239 = pneg %p52
        %p240 = pneg %p49
        %p241 = scmp.lt.s32.totalorder %s24, 0
        %s242 = scalar_select %p241, %s24, 0
        %s243 = smul.addr %s242, 4
        %s244 = scalar_lea.vmem %s1, %s243
        %p245 = pneg %p78
        %p246 = pneg %p75
        %p247 = scmp.lt.s32.totalorder %s24, 0
        %s248 = scalar_select %p247, %s24, 0
        %s249 = scalar_lea.vmem %s2, %s248
        %p250 = pneg %p104
        %p251 = pneg %p101
        %s252 = smul.u32 4, %s24
        %p253 = scmp.lt.s32.totalorder %s252, 3
        %s254 = scalar_select %p253, %s252, 3
        %s255 = smul.addr %s254, 4
        %s256 = scalar_lea.vmem %s3, %s255
        %p257 = pneg %p130
        %p258 = pneg %p127
        %p259 = pneg %p151
        %p260 = pneg %p148
        %p261 = pneg %p177
        %p262 = pneg %p174
        %s263 = sand.u32 %s164, 1
        %s264 = scalar_lea.sflag [#allocation4], %s263
        %s265 = sand.u32 %s164, 1
        %s266 = smul.addr %s265, 8
        %s267 = scalar_lea.vmem [#allocation3], %s266
        %p268 = scmp.lt.s32.totalorder %s23, 1
        %s269 = scalar_select %p268, %s23, 1
        %s270 = smul.addr %s269, 8
        %s271 = scalar_lea.vmem %s0, %s270
        %p272 = scmp.lt.s32.totalorder %s24, 0
        %s273 = scalar_select %p272, %s24, 0
        %s274 = smul.addr %s273, 4
        %s275 = scalar_lea.vmem %s1, %s274
        %p276 = scmp.lt.s32.totalorder %s24, 0
        %s277 = scalar_select %p276, %s24, 0
        %s278 = scalar_lea.vmem %s2, %s277
        %s279 = smul.u32 4, %s24
        %p280 = scmp.lt.s32.totalorder %s279, 3
        %s281 = scalar_select %p280, %s279, 3
        %s282 = smul.addr %s281, 4
        %s283 = scalar_lea.vmem %s3, %s282
        %s284 = smul.u32 4, %s24
        %p286 = scmp.eq.s32.totalorder %s24, 0
        // Predicated region
        $region41: #{mlp_forward.1} parent=39 // pred_check
          %p287 = pneg %p286
        $region42: #{mlp_forward.1} parent=39 // pred_check_branch
          %289 = sbr.rel (%p287) target = $region44
        $region43: #{mlp_forward.1} parent=39 // pred_region
          %vm290 = vcmask 64512
          %291 = vst.msk [vmem:[#allocation2] sm:$0xff] %vm290, 0.0
        $region44: #{mlp_forward.1} parent=39 // pred_fallthru
          _
        %v292 = vld [vmem:[%s271] sm:$0xff]
        %v293 = vpack.c.bf16 %v292, %v292
        %v294 = vld [vmem:[%s275] sm:$0xf]
        %v295 = vld [vmem:[%s275 + $0x4] sm:$0xf]
        %v296 = vld [vmem:[%s278] sm:$0x1]
        %v298 = vlaneseq
        %v299 = vshrl.u32 %v298, 7
        %v300 = vsub.s32 0, %v299
        %v301 = vrot.slane %v296, %v300
        %v305 = vunpack.c.l.b16 %v294
        %v306 = vunpack.c.l.b16 %v295
        %v307 = vpack.c.b16 %v306, %v305
        %vm309 = vcmask 130048
        %v311 = vsel %vm309, %v293, 0
        %313 = vmatprep.subr.bf16.mxu0 0
        %314 = vmatpush1.bf16.msra.mxu0 %v307
        %315 = vmatprep.subr.bf16.mxu0 0
        %316 = vmatpush1.bf16.msra.mxu0 0
        %317 = vmatprep.subr.bf16.mxu0 0
        %318 = vmatpush1.bf16.msra.mxu0 0
        %319 = vmatprep.subr.bf16.mxu0 0
        %320 = vmatpush1.bf16.msra.mxu0 0
        %321 = vmatprep.subr.bf16.mxu0 0
        %322 = vmatpush1.bf16.msra.mxu0 0
        %323 = vmatprep.subr.bf16.mxu0 0
        %324 = vmatpush1.bf16.msra.mxu0 0
        %325 = vmatprep.subr.bf16.mxu0 0
        %326 = vmatpush1.bf16.msra.mxu0 0
        %327 = vmatprep.subr.bf16.mxu0 0
        %328 = vmatpush1.bf16.msra.mxu0 0
        %329 = vmatprep.subr.bf16.mxu0 0
        %330 = vmatpush1.bf16.msra.mxu0 0
        %331 = vmatprep.subr.bf16.mxu0 0
        %332 = vmatpush1.bf16.msra.mxu0 0
        %333 = vmatprep.subr.bf16.mxu0 0
        %334 = vmatpush1.bf16.msra.mxu0 0
        %335 = vmatprep.subr.bf16.mxu0 0
        %336 = vmatpush1.bf16.msra.mxu0 0
        %337 = vmatprep.subr.bf16.mxu0 0
        %338 = vmatpush1.bf16.msra.mxu0 0
        %339 = vmatprep.subr.bf16.mxu0 0
        %340 = vmatpush1.bf16.msra.mxu0 0
        %341 = vmatprep.subr.bf16.mxu0 0
        %342 = vmatpush1.bf16.msra.mxu0 0
        %343 = vmatprep.subr.bf16.mxu0 0
        %344 = vmatpush1.bf16.msra.mxu0 0
        %345 = vmatprep.mubr.bf16.mxu0 0
        %346 = vmatmul.mubr.bf16.gmra.mrb[0].mxu0 %v311
        %v347 = vpop.f32.mrb[0].mxu0
        %v348 = vadd.f32 %v301, %v347
        %v349 = vpop.f32.mrb[0].mxu0
        %v350 = vpop.f32.mrb[0].mxu0
        %v351 = vpop.f32.mrb[0].mxu0
        %352 = vdwg.mxu0
        %v353 = vmax.f32 %v348, 0.0
        %v354 = vld [vmem:[#allocation2] sm:$0xff]
        %v355 = vpack.c.bf16 %v353, %v353
        %v356 = vld [vmem:[%s283] sm:$0xf]
        %v357 = vld [vmem:[%s283 + $0x4] sm:$0xf]
        %v358 = vld [vmem:[%s283 + $0x8] sm:$0xf]
        %v359 = vld [vmem:[%s283 + $0xc] sm:$0xf]
        %v364 = vunpack.c.l.b16 %v356
        %v365 = vunpack.c.l.b16 %v357
        %v366 = vunpack.c.l.b16 %v358
        %v367 = vunpack.c.l.b16 %v359
        %v368 = vpack.c.b16 %v365, %v364
        %v369 = vpack.c.b16 %v367, %v366
        %vm372 = vcmask 261120
        %v374 = vsel %vm372, %v355, 0
        %376 = vmatprep.subr.bf16.mxu0 0
        %377 = vmatpush1.bf16.msra.mxu0 %v368
        %378 = vmatprep.subr.bf16.mxu0 0
        %379 = vmatpush1.bf16.msra.mxu0 %v369
        %380 = vmatprep.subr.bf16.mxu0 0
        %381 = vmatpush1.bf16.msra.mxu0 0
        %382 = vmatprep.subr.bf16.mxu0 0
        %383 = vmatpush1.bf16.msra.mxu0 0
        %384 = vmatprep.subr.bf16.mxu0 0
        %385 = vmatpush1.bf16.msra.mxu0 0
        %386 = vmatprep.subr.bf16.mxu0 0
        %387 = vmatpush1.bf16.msra.mxu0 0
        %388 = vmatprep.subr.bf16.mxu0 0
        %389 = vmatpush1.bf16.msra.mxu0 0
        %390 = vmatprep.subr.bf16.mxu0 0
        %391 = vmatpush1.bf16.msra.mxu0 0
        %392 = vmatprep.subr.bf16.mxu0 0
        %393 = vmatpush1.bf16.msra.mxu0 0
        %394 = vmatprep.subr.bf16.mxu0 0
        %395 = vmatpush1.bf16.msra.mxu0 0
        %396 = vmatprep.subr.bf16.mxu0 0
        %397 = vmatpush1.bf16.msra.mxu0 0
        %398 = vmatprep.subr.bf16.mxu0 0
        %399 = vmatpush1.bf16.msra.mxu0 0
        %400 = vmatprep.subr.bf16.mxu0 0
        %401 = vmatpush1.bf16.msra.mxu0 0
        %402 = vmatprep.subr.bf16.mxu0 0
        %403 = vmatpush1.bf16.msra.mxu0 0
        %404 = vmatprep.subr.bf16.mxu0 0
        %405 = vmatpush1.bf16.msra.mxu0 0
        %406 = vmatprep.subr.bf16.mxu0 0
        %407 = vmatpush1.bf16.msra.mxu0 0
        %408 = vmatprep.mubr.bf16.mxu0 0
        %409 = vmatmul.mubr.bf16.gmra.mrb[0].mxu0 %v374
        %v410 = vpop.f32.mrb[0].mxu0
        %v411 = vadd.f32 0.0, %v410
        %v412 = vpop.f32.mrb[0].mxu0
        %v413 = vpop.f32.mrb[0].mxu0
        %v414 = vpop.f32.mrb[0].mxu0
        %415 = vdwg.mxu0
        %v416 = vadd.f32 %v354, %v411
        %vm417 = vcmask 64512
        %418 = vst.msk [vmem:[#allocation2] sm:$0xff] %vm417, %v416
        // Predicated region
        $region45: #{mlp_forward.1} parent=39 // pred_check
          %p419 = pneg %p286
        $region46: #{mlp_forward.1} parent=39 // pred_check_branch
          %421 = sbr.rel (%p419) target = $region48
        $region47: #{mlp_forward.1} parent=39 // pred_region
          %v422 = vld [vmem:[#allocation2] sm:$0xff]
          %v423 = vld [vmem:[%s4] sm:$0x1]
          %v425 = vlaneseq
          %v426 = vshrl.u32 %v425, 7
          %v427 = vsub.s32 0, %v426
          %v428 = vrot.slane %v423, %v427
          %v430 = vadd.f32 %v422, %v428
          %431 = vst.msk [vmem:[%s267] sm:$0xff] %vm417, %v430
        $region48: #{mlp_forward.1} parent=39 // pred_fallthru
          _
        %s432 = sand.u32 %s164, 1
        %s433 = scalar_lea.sflag [#allocation4], %s432
        %s434 = sand.u32 %s164, 1
        %s435 = smul.addr %s434, 8
        %s436 = scalar_lea.vmem [#allocation3], %s435
        // Predicated region
        $region49: #{mlp_forward.1} parent=39 // pred_check
          %p437 = pneg %p174
        $region50: #{mlp_forward.1} parent=39 // pred_check_branch
          %439 = sbr.rel (%p437) target = $region52
        $region51: #{mlp_forward.1} parent=39 // pred_region
          %s441 = ssub.s32 128, 128
          %442 = vsyncadd %s433, %s441
          %s443 = smul.addr %s23, 128
          %s444 = scalar_lea.hbm %s5, %s443
          %s446 = sshll.u32 %s436, 4
          %s447 = int_to_ptr.vmem [resolvable:$true] %s446
          %449 = dma.vmem_to_hbm [thread:$0]  %s447, 128, %s444, %s433
        $region52: #{mlp_forward.1} parent=39 // pred_fallthru
          _
      $region40: #{mlp_forward.1} parent=5 // pred_fallthru
        _
      %p450 = scmp.le.s32.totalorder 2, %s14
      // Predicated region
      $region53: #{mlp_forward.1} parent=5 // pred_check
        %p451 = pneg %p450
      $region54: #{mlp_forward.1} parent=5 // pred_check_branch
        %453 = sbr.rel (%p451) target = $region56
      $region55: #{mlp_forward.1} parent=5 // pred_region
        %s454 = ssub.s32 %s14, 2
        // Predicated region
        $region57: #{mlp_forward.1} parent=55 // pred_check
          %p455 = pneg %p180
        $region58: #{mlp_forward.1} parent=55 // pred_check_branch
          %457 = sbr.rel (%p455) target = $region60
        $region59: #{mlp_forward.1} parent=55 // pred_region
          %s458 = sand.u32 %s165, 1
          %s459 = scalar_lea.sflag [#allocation4], %s458
          %s460 = sand.u32 %s165, 1
          %s461 = smul.addr %s460, 8
          %s462 = scalar_lea.vmem [#allocation3], %s461
          %463 = dma.done %s459, 128
        $region60: #{mlp_forward.1} parent=55 // pred_fallthru
          _
      $region56: #{mlp_forward.1} parent=5 // pred_fallthru
        _
    $region6: #{mlp_forward.1} parent=1 // loop_footer
      %s18 = sadd.s32 1, %s14
    $region7: #{mlp_forward.1} parent=1 // loop_footer_branch
      %13 = sbr.rel target = $region3
    $region8: #{mlp_forward.1} parent=1 // loop_exit
      _
    %464 = vsyncpa [#allocation4], 1
    %s465 = scalar_lea.sflag [#allocation4], 1
    %466 = vsyncpa %s465, 1

</llo_original>
